<compile_context>
chip_gen: v6e
topology: v6e:2x2x1
jax: 0.10.0
libtpu: 0.0.40
codegen_flags: <defaults>
</compile_context>

<pallas_src>
import jax
import jax.numpy as jnp
from jax.experimental import pallas as pl
from jax.experimental.pallas import tpu as pltpu


# ----------------------------- Pallas kernel ------------------------------- #
def _make_kernel(L, a_rows, hidden_dims, in_dims, h_penult, w_offs, w_eff_off,
                 fcol_C, fcol_bias):
    nh = len(hidden_dims)

    def kernel(x_ref, a_ref, w_ref, f_ref, out_ref):
        x = x_ref[...]                                      # (D, TB) bf16

        # ---- CrossNet, restructured -------------------------------------
        # One well-shaped MXU pass for p_j = a_j . x0, then an O(L) f32 VPU
        # recurrence; rows j track a_j . x_l exactly for every level l.
        P = jnp.dot(a_ref[...], x,
                    preferred_element_type=jnp.float32)     # (a_rows, TB) f32
        T = P
        for l in range(L):
            u = T[l:l + 1, :]                                # (1, TB)  u_l = w_l . x_l
            c = f_ref[0:a_rows, fcol_C + l:fcol_C + l + 1]   # (a_rows, 1)  a_j . b_l
            T = P * u + c + T
        cross_logit = T[L:L + 1, :]                          # (1, TB)  fc_cross . x_L

        # ---- MLP (ReLU hidden layers; last no-act linear folded into fc) --
        h = x                                                # bf16 MXU operand
        for i in range(nh):
            od, idim = hidden_dims[i], in_dims[i]
            Wt = w_ref[w_offs[i]:w_offs[i] + od, 0:idim]     # (od, idim) bf16
            b = f_ref[0:od, i:i + 1]                         # (od, 1)    f32
            h = jnp.maximum(
                jnp.dot(Wt, h, preferred_element_type=jnp.float32) + b, 0.0)
            h = h.astype(jnp.bfloat16)

        # w_eff lives in a 16-row aligned bf16 segment; rows past 0 are zeros,
        # so row 0 of the dot result is the folded (W_last @ fc_w_mlp) . h term.
        weff_blk = w_ref[w_eff_off:w_eff_off + 16, 0:h_penult]
        mlp_logit = jnp.dot(weff_blk, h,
                            preferred_element_type=jnp.float32)[0:1, :]

        bias = f_ref[0:1, fcol_bias:fcol_bias + 1]           # (1, 1) folded bias
        out_ref[...] = jax.nn.sigmoid(cross_logit + mlp_logit + bias)  # lane-dense

    return kernel


# ------------------------------- wrapper ----------------------------------- #
def deepcross_pallas(xT, cross_w, cross_b, mlp_params, fc_w, fc_b,
                     tb_max=2048, min_tiles=2):
    """xT: (D, B) activations (feature-on-sublane / batch-on-lane).
    Returns (B,) f32 probabilities."""
    D, B = xT.shape
    L = cross_w.shape[0]

    # ---- batch tiling: big lane-dense tiles, but keep >= min_tiles tiles so
    # the "parallel" grid axis can shard across both TensorCores on v7x. -----
    B128 = ((B + 127) // 128) * 128
    tb = max(128, min((tb_max // 128) * 128, B128))
    if B128 >= min_tiles * 128 and tb * min_tiles > B128:
        tb = max(128, (B128 // min_tiles) // 128 * 128)
    num_tiles = pl.cdiv(B128, tb)
    B_pad = num_tiles * tb

    # bf16 streamed activations (halves HBM bytes); f32 accumulation in-kernel.
    xT = xT.astype(jnp.bfloat16)
    if B_pad != B:
        xT = jnp.pad(xT, ((0, 0), (0, B_pad - B)))   # zero columns -> finite, sliced off

    # ---- fold the last (no-activation) MLP linear into the final fc --------
    hidden = mlp_params[:-1]
    hidden_dims = tuple(int(W.shape[1]) for (W, _) in hidden)
    in_dims = (D,) + hidden_dims[:-1]
    W_last, b_last = mlp_params[-1]
    h_penult = int(W_last.shape[0])
    wc, wm = fc_w[:D], fc_w[D:]
    w_eff = W_last @ wm                                   # (h_penult,)
    bias_eff = fc_b[0] + jnp.dot(b_last, wm)              # scalar

    # ---- cross restructuring constants: A = [cross_w ; fc_cross ; 0pad] ----
    a_rows = ((L + 1 + 7) // 8) * 8
    A = jnp.zeros((a_rows, D), jnp.float32).at[:L].set(cross_w).at[L].set(wc)
    C = A @ cross_b.T                                     # (a_rows, L): a_j . b_l
    A_bf16 = A.astype(jnp.bfloat16)

    # ---- bf16 weight slab: hidden W^T segments (16-row aligned) + w_eff ----
    w_offs, off = [], 0
    for od in hidden_dims:
        w_offs.append(off)
        off = ((off + od + 15) // 16) * 16
    w_eff_off = off
    rows_w = ((w_eff_off + 1 + 15) // 16) * 16            # = w_eff_off + 16
    cols_w = max(max(in_dims), h_penult)
    wslab = jnp.zeros((rows_w, cols_w), jnp.float32)
    for o, (W, _), idim in zip(w_offs, hidden, in_dims):
        wslab = wslab.at[o:o + W.shape[1], :idim].set(W.T)
    wslab = wslab.at[w_eff_off, :h_penult].set(w_eff).astype(jnp.bfloat16)

    # ---- f32 slab: hidden biases (one col each), C (L cols), folded bias ---
    nh = len(hidden)
    fcol_C, fcol_bias = nh, nh + L
    rows_f = ((max(max(hidden_dims), a_rows) + 7) // 8) * 8
    fslab = jnp.zeros((rows_f, nh + L + 1), jnp.float32)
    for i, (_, b) in enumerate(hidden):
        fslab = fslab.at[:b.shape[0], i].set(b)
    fslab = fslab.at[:a_rows, fcol_C:fcol_C + L].set(C)
    fslab = fslab.at[0, fcol_bias].set(bias_eff)

    # ---- advisory cost estimate --------------------------------------------
    flops_col = 2 * a_rows * D + 3 * L * a_rows + 2 * h_penult
    for od, idim in zip(hidden_dims, in_dims):
        flops_col += 2 * od * idim
    cost = pl.CostEstimate(
        flops=int(B_pad) * int(flops_col),
        transcendentals=int(B_pad),
        bytes_accessed=int(2 * xT.size + 4 * B_pad + 2 * A_bf16.size
                           + 2 * wslab.size + 4 * fslab.size),
    )

    kernel = _make_kernel(L, a_rows, hidden_dims, in_dims, h_penult,
                          tuple(w_offs), w_eff_off, fcol_C, fcol_bias)
    out = pl.pallas_call(
        kernel,
        out_shape=jax.ShapeDtypeStruct((1, B_pad), jnp.float32),
        grid=(num_tiles,),
        in_specs=[
            pl.BlockSpec((D, tb), lambda i: (0, i)),        # streamed batch tiles
            pl.BlockSpec(A_bf16.shape, lambda i: (0, 0)),   # resident weights
            pl.BlockSpec(wslab.shape, lambda i: (0, 0)),
            pl.BlockSpec(fslab.shape, lambda i: (0, 0)),
        ],
        out_specs=pl.BlockSpec((1, tb), lambda i: (0, i)),  # lane-dense unmasked vst
        compiler_params=pltpu.CompilerParams(
            dimension_semantics=("parallel",)),
        cost_estimate=cost,
    )(xT, A_bf16, wslab, fslab)
    return out[0, :B]


# ----------------------------- plain-JAX glue ------------------------------ #
def embed_lookup_t(data, table, offsets):
    # TODO(synk): the embedding row-gather stays in XLA glue — a data-dependent
    # gather is not expressible with a BlockSpec index_map without per-row DMA.
    # The gather is emitted directly in (D, B) feature-major bf16 layout so no
    # separate HBM transpose/pad pass of x is needed before the kernel.
    idx = data + offsets[None, :]                      # (B, F)
    emb = jnp.take(table, idx, axis=0)                 # (B, F, E)
    xT = jnp.transpose(emb, (1, 2, 0)).reshape(-1, data.shape[0])   # (F*E, B)
    return xT.astype(jnp.bfloat16)


def embed_lookup(data, table, offsets):
    idx = data + offsets[None, :]
    return jnp.take(table, idx, axis=0).reshape(data.shape[0], -1)  # (B, F*E) f32


def ref_forward(x, cross_w, cross_b, mlp_params, fc_w, fc_b):
    x0, xc = x, x
    for l in range(cross_w.shape[0]):
        xw = jnp.sum(xc * cross_w[l], axis=-1, keepdims=True)
        xc = x0 * xw + cross_b[l] + xc
    h = x
    for i, (W, b) in enumerate(mlp_params):
        h = h @ W + b
        if i < len(mlp_params) - 1:
            h = jnp.maximum(h, 0.0)
    cat = jnp.concatenate([xc, h], axis=-1)
    logits = cat @ fc_w + fc_b[0]
    return jax.nn.sigmoid(logits)


# --------------------------------- main ------------------------------------ #
if __name__ == "__main__":
    key = jax.random.PRNGKey(0)

    # Module hyper-parameters (consistent with the PyTorch __init__).
    feature_dims = [10, 20, 30, 40]        # 4 categorical fields
    embed_size = 8
    hidden_nbs = [64, 32]
    num_layer = 5                          # CrossNet layers
    B = 512                                # 2 grid tiles of 256 (>=2 for v7x)
    F = len(feature_dims)
    D = F * embed_size                     # embed_out_dim = 32

    keys = jax.random.split(key, 12)

    emb_table = 0.1 * jax.random.normal(keys[0], (sum(feature_dims), embed_size), jnp.float32)
    offsets = jnp.array([0] + list(jnp.cumsum(jnp.array(feature_dims))[:-1]), jnp.int32)

    cross_w = 0.1 * jax.random.normal(keys[1], (num_layer, D), jnp.float32)
    cross_b = 0.1 * jax.random.normal(keys[2], (num_layer, D), jnp.float32)

    # My_MLP: D -> 64 (ReLU) -> 32 (ReLU) -> 32 (no act, last_act=None)
    dims = [D] + hidden_nbs + [hidden_nbs[-1]]
    mlp_params = []
    for i in range(len(dims) - 1):
        W = 0.1 * jax.random.normal(keys[3 + i], (dims[i], dims[i + 1]), jnp.float32)
        b = 0.1 * jax.random.normal(keys[7 + i], (dims[i + 1],), jnp.float32)
        mlp_params.append((W, b))

    fc_w = 0.1 * jax.random.normal(keys[10], (hidden_nbs[-1] + D,), jnp.float32)
    fc_b = 0.1 * jax.random.normal(keys[11], (1,), jnp.float32)

    # Deterministic example input: (B, F) categorical indices.
    data = jnp.stack(
        [jax.random.randint(jax.random.fold_in(key, 100 + f), (B,), 0, feature_dims[f])
         for f in range(F)],
        axis=1,
    ).astype(jnp.int32)

    @jax.jit
    def forward(d):
        xT = embed_lookup_t(d, emb_table, offsets)     # (D, B) bf16, gather emitted transposed
        return deepcross_pallas(xT, cross_w, cross_b, mlp_params, fc_w, fc_b)

    out = jax.block_until_ready(forward(data))

    # f32 reference follows the original module semantics exactly.
    x_f32 = embed_lookup(data, emb_table, offsets)
    ref = ref_forward(x_f32, cross_w, cross_b, mlp_params, fc_w, fc_b)

    assert out.shape == (B,)
    # bf16 streamed activations / MXU operands (f32 accumulation): compare at
    # bf16-level tolerance against the f32 reference.
    assert jnp.allclose(out, ref, atol=5e-3, rtol=5e-3), \
        float(jnp.max(jnp.abs(out - ref)))

    print("KERNEL_OK")
</pallas_src>

<mosaic_0001>
module attributes {stable_mosaic.version = 11 : i64} {
  func.func @kernel(%arg0: i32, %arg1: memref<32x256xbf16, #tpu.memory_space<vmem>>, %arg2: memref<8x32xbf16, #tpu.memory_space<vmem>>, %arg3: memref<112x64xbf16, #tpu.memory_space<vmem>>, %arg4: memref<64x8xf32, #tpu.memory_space<vmem>>, %arg5: memref<1x256xf32, #tpu.memory_space<vmem>>) attributes {dimension_semantics = [#tpu.dimension_semantics<parallel>], iteration_bounds = array<i64: 2>, scalar_prefetch = 0 : i64, scratch_operands = 0 : i64, tpu.core_type = #tpu.core_type<tc>, window_params = [{transform_indices = @transform_0, window_bounds = array<i64: 32, 256>}, {pipeline_mode = #tpu.pipeline_mode<synchronous>, transform_indices = @transform_1, window_bounds = array<i64: 8, 32>}, {pipeline_mode = #tpu.pipeline_mode<synchronous>, transform_indices = @transform_2, window_bounds = array<i64: 112, 64>}, {pipeline_mode = #tpu.pipeline_mode<synchronous>, transform_indices = @transform_3, window_bounds = array<i64: 64, 8>}, {transform_indices = @transform_4, window_bounds = array<i64: 1, 256>}]} {
    %c0 = arith.constant 0 : index
    %c0_0 = arith.constant 0 : index
    %0 = vector.load %arg1[%c0, %c0_0] : memref<32x256xbf16, #tpu.memory_space<vmem>>, vector<32x256xbf16>
    %c0_1 = arith.constant 0 : index
    %c0_2 = arith.constant 0 : index
    %1 = vector.load %arg2[%c0_1, %c0_2] : memref<8x32xbf16, #tpu.memory_space<vmem>>, vector<8x32xbf16>
    %cst = arith.constant dense<0.000000e+00> : vector<8x256xf32>
    %2 = tpu.matmul %1, %0, %cst {dimension_numbers = #tpu.dot_dimension_numbers<[1], [0], [0], [1], [0, 0, 1, 1], [], []>} : vector<8x32xbf16>, vector<32x256xbf16>, vector<8x256xf32> -> vector<8x256xf32>
    %3 = vector.extract_strided_slice %2 {offsets = [0, 0], sizes = [1, 256], strides = [1, 1]} : vector<8x256xf32> to vector<1x256xf32>
    %c0_3 = arith.constant 0 : index
    %c2 = arith.constant 2 : index
    %4 = vector.load %arg4[%c0_3, %c2] : memref<64x8xf32, #tpu.memory_space<vmem>>, vector<8x1xf32>
    %5 = vector.broadcast %3 : vector<1x256xf32> to vector<8x256xf32>
    %6 = arith.mulf %2, %5 : vector<8x256xf32>
    %7 = vector.broadcast %4 : vector<8x1xf32> to vector<8x256xf32>
    %8 = arith.addf %6, %7 : vector<8x256xf32>
    %9 = arith.addf %8, %2 : vector<8x256xf32>
    %10 = vector.extract_strided_slice %9 {offsets = [1, 0], sizes = [1, 256], strides = [1, 1]} : vector<8x256xf32> to vector<1x256xf32>
    %c0_4 = arith.constant 0 : index
    %c3 = arith.constant 3 : index
    %11 = vector.load %arg4[%c0_4, %c3] : memref<64x8xf32, #tpu.memory_space<vmem>>, vector<8x1xf32>
    %12 = vector.broadcast %10 : vector<1x256xf32> to vector<8x256xf32>
    %13 = arith.mulf %2, %12 : vector<8x256xf32>
    %14 = vector.broadcast %11 : vector<8x1xf32> to vector<8x256xf32>
    %15 = arith.addf %13, %14 : vector<8x256xf32>
    %16 = arith.addf %15, %9 : vector<8x256xf32>
    %17 = vector.extract_strided_slice %16 {offsets = [2, 0], sizes = [1, 256], strides = [1, 1]} : vector<8x256xf32> to vector<1x256xf32>
    %c0_5 = arith.constant 0 : index
    %c4 = arith.constant 4 : index
    %18 = vector.load %arg4[%c0_5, %c4] : memref<64x8xf32, #tpu.memory_space<vmem>>, vector<8x1xf32>
    %19 = vector.broadcast %17 : vector<1x256xf32> to vector<8x256xf32>
    %20 = arith.mulf %2, %19 : vector<8x256xf32>
    %21 = vector.broadcast %18 : vector<8x1xf32> to vector<8x256xf32>
    %22 = arith.addf %20, %21 : vector<8x256xf32>
    %23 = arith.addf %22, %16 : vector<8x256xf32>
    %24 = vector.extract_strided_slice %23 {offsets = [3, 0], sizes = [1, 256], strides = [1, 1]} : vector<8x256xf32> to vector<1x256xf32>
    %c0_6 = arith.constant 0 : index
    %c5 = arith.constant 5 : index
    %25 = vector.load %arg4[%c0_6, %c5] : memref<64x8xf32, #tpu.memory_space<vmem>>, vector<8x1xf32>
    %26 = vector.broadcast %24 : vector<1x256xf32> to vector<8x256xf32>
    %27 = arith.mulf %2, %26 : vector<8x256xf32>
    %28 = vector.broadcast %25 : vector<8x1xf32> to vector<8x256xf32>
    %29 = arith.addf %27, %28 : vector<8x256xf32>
    %30 = arith.addf %29, %23 : vector<8x256xf32>
    %31 = vector.extract_strided_slice %30 {offsets = [4, 0], sizes = [1, 256], strides = [1, 1]} : vector<8x256xf32> to vector<1x256xf32>
    %c0_7 = arith.constant 0 : index
    %c6 = arith.constant 6 : index
    %32 = vector.load %arg4[%c0_7, %c6] : memref<64x8xf32, #tpu.memory_space<vmem>>, vector<8x1xf32>
    %33 = vector.broadcast %31 : vector<1x256xf32> to vector<8x256xf32>
    %34 = arith.mulf %2, %33 : vector<8x256xf32>
    %35 = vector.broadcast %32 : vector<8x1xf32> to vector<8x256xf32>
    %36 = arith.addf %34, %35 : vector<8x256xf32>
    %37 = arith.addf %36, %30 : vector<8x256xf32>
    %38 = vector.extract_strided_slice %37 {offsets = [5, 0], sizes = [1, 256], strides = [1, 1]} : vector<8x256xf32> to vector<1x256xf32>
    %c0_8 = arith.constant 0 : index
    %c0_9 = arith.constant 0 : index
    %39 = vector.load %arg3[%c0_8, %c0_9] : memref<112x64xbf16, #tpu.memory_space<vmem>>, vector<64x32xbf16>
    %c0_10 = arith.constant 0 : index
    %c0_11 = arith.constant 0 : index
    %40 = vector.load %arg4[%c0_10, %c0_11] : memref<64x8xf32, #tpu.memory_space<vmem>>, vector<64x1xf32>
    %cst_12 = arith.constant dense<0.000000e+00> : vector<64x256xf32>
    %41 = tpu.matmul %39, %0, %cst_12 {dimension_numbers = #tpu.dot_dimension_numbers<[1], [0], [0], [1], [0, 0, 1, 1], [], []>} : vector<64x32xbf16>, vector<32x256xbf16>, vector<64x256xf32> -> vector<64x256xf32>
    %42 = vector.broadcast %40 : vector<64x1xf32> to vector<64x256xf32>
    %43 = arith.addf %41, %42 : vector<64x256xf32>
    %cst_13 = arith.constant 0.000000e+00 : f32
    %44 = vector.broadcast %cst_13 : f32 to vector<64x256xf32>
    %45 = arith.maximumf %43, %44 : vector<64x256xf32>
    %46 = arith.truncf %45 : vector<64x256xf32> to vector<64x256xbf16>
    %c64 = arith.constant 64 : index
    %c0_14 = arith.constant 0 : index
    %47 = vector.load %arg3[%c64, %c0_14] : memref<112x64xbf16, #tpu.memory_space<vmem>>, vector<32x64xbf16>
    %c0_15 = arith.constant 0 : index
    %c1 = arith.constant 1 : index
    %48 = vector.load %arg4[%c0_15, %c1] : memref<64x8xf32, #tpu.memory_space<vmem>>, vector<32x1xf32>
    %cst_16 = arith.constant dense<0.000000e+00> : vector<32x256xf32>
    %49 = tpu.matmul %47, %46, %cst_16 {dimension_numbers = #tpu.dot_dimension_numbers<[1], [0], [0], [1], [0, 0, 1, 1], [], []>} : vector<32x64xbf16>, vector<64x256xbf16>, vector<32x256xf32> -> vector<32x256xf32>
    %50 = vector.broadcast %48 : vector<32x1xf32> to vector<32x256xf32>
    %51 = arith.addf %49, %50 : vector<32x256xf32>
    %cst_17 = arith.constant 0.000000e+00 : f32
    %52 = vector.broadcast %cst_17 : f32 to vector<32x256xf32>
    %53 = arith.maximumf %51, %52 : vector<32x256xf32>
    %54 = arith.truncf %53 : vector<32x256xf32> to vector<32x256xbf16>
    %c96 = arith.constant 96 : index
    %c0_18 = arith.constant 0 : index
    %55 = vector.load %arg3[%c96, %c0_18] : memref<112x64xbf16, #tpu.memory_space<vmem>>, vector<16x32xbf16>
    %cst_19 = arith.constant dense<0.000000e+00> : vector<16x256xf32>
    %56 = tpu.matmul %55, %54, %cst_19 {dimension_numbers = #tpu.dot_dimension_numbers<[1], [0], [0], [1], [0, 0, 1, 1], [], []>} : vector<16x32xbf16>, vector<32x256xbf16>, vector<16x256xf32> -> vector<16x256xf32>
    %57 = vector.extract_strided_slice %56 {offsets = [0, 0], sizes = [1, 256], strides = [1, 1]} : vector<16x256xf32> to vector<1x256xf32>
    %c0_20 = arith.constant 0 : index
    %c7 = arith.constant 7 : index
    %58 = vector.load %arg4[%c0_20, %c7] : memref<64x8xf32, #tpu.memory_space<vmem>>, vector<1x1xf32>
    %59 = arith.addf %38, %57 : vector<1x256xf32>
    %60 = vector.broadcast %58 : vector<1x1xf32> to vector<1x256xf32>
    %61 = arith.addf %59, %60 : vector<1x256xf32>
    %62 = arith.negf %61 : vector<1x256xf32>
    %63 = math.exp %62 : vector<1x256xf32>
    %cst_21 = arith.constant 1.000000e+00 : f32
    %64 = vector.broadcast %cst_21 : f32 to vector<1x256xf32>
    %65 = arith.addf %64, %63 : vector<1x256xf32>
    %66 = arith.divf %64, %65 : vector<1x256xf32>
    %c0_22 = arith.constant 0 : index
    %c0_23 = arith.constant 0 : index
    %67 = vector.load %arg5[%c0_22, %c0_23] : memref<1x256xf32, #tpu.memory_space<vmem>>, vector<1x256xf32>
    tpu.vector_store %arg5[%c0_22, %c0_23], %66 {strides = array<i32>} : memref<1x256xf32, #tpu.memory_space<vmem>>, vector<1x256xf32>,
    return
  }
  func.func @transform_0(%arg0: i32) -> (i32, i32) {
    %c0_i32 = arith.constant 0 : i32
    %c0_i32_0 = arith.constant 0 : i32
    return %c0_i32, %arg0 : i32, i32
  }
  func.func @transform_1(%arg0: i32) -> (i32, i32) {
    %c0_i32 = arith.constant 0 : i32
    %c0_i32_0 = arith.constant 0 : i32
    %c0_i32_1 = arith.constant 0 : i32
    return %c0_i32, %c0_i32_0 : i32, i32
  }
  func.func @transform_2(%arg0: i32) -> (i32, i32) {
    %c0_i32 = arith.constant 0 : i32
    %c0_i32_0 = arith.constant 0 : i32
    %c0_i32_1 = arith.constant 0 : i32
    return %c0_i32, %c0_i32_0 : i32, i32
  }
  func.func @transform_3(%arg0: i32) -> (i32, i32) {
    %c0_i32 = arith.constant 0 : i32
    %c0_i32_0 = arith.constant 0 : i32
    %c0_i32_1 = arith.constant 0 : i32
    return %c0_i32, %c0_i32_0 : i32, i32
  }
  func.func @transform_4(%arg0: i32) -> (i32, i32) {
    %c0_i32 = arith.constant 0 : i32
    %c0_i32_0 = arith.constant 0 : i32
    return %c0_i32, %arg0 : i32, i32
  }
}

</mosaic_0001>

<llo_original>
// kernel: forward.1
$region0: #{forward.1}
  #allocation0 [shape = 'u32[]', space=smem, size = 0x4, offset = 0x4, fixed_abs, tag = 'smem constant byte address 0x4 - core index']
  #allocation1 [shape = 'u32[144,128]{1,0:T(1,128)}', space=vmem, size = 0x12000, scoped, tag = 'internal scratch']
  %s0 = inlined_call_operand.vmem [shape: bf16[32,512], index: 0, kind: input, shape index: {}]
  %s1 = inlined_call_operand.vmem [shape: bf16[8,32], index: 1, kind: input, shape index: {}]
  %s2 = inlined_call_operand.vmem [shape: bf16[112,64], index: 2, kind: input, shape index: {}]
  %s3 = inlined_call_operand.vmem [shape: f32[64,8], index: 3, kind: input, shape index: {}]
  %s4 = inlined_call_operand.hbm [shape: f32[1,512], index: 4, kind: output, shape index: {}]
  %s5 = sld [smem:[#allocation0]]
  $region87: #{forward.1} parent=0
    _
  %s7 = ssub.s32 1, %s5
  %s8 = scalar_select 0, %s7, %s5
  $region1: #{forward.1} parent=0
    #allocation2 [shape = 'u8[32768]{0}', space=vmem, size = 0x8000, scoped, tag = 'input window, operand 0']
    #allocation3 [shape = 'u8[2048]{0}', space=vmem, size = 0x800, scoped, tag = 'output window, operand 0']
    #allocation4 [shape = 's32[2]{0}', space=sflag, size = 0x8, scoped, tag = 'scoped memory for forward.1']
    %9 = vsyncpa [#allocation4], 0
    %s10 = scalar_lea.sflag [#allocation4], 1
    %11 = vsyncpa %s10, 0
    loop: start=0, step=1, limit=4
    $region2: #{forward.1} parent=1 // loop_pre_header
      _
    $region3: #{forward.1} parent=1 // loop_header
      %s13 = sphi 0, %s17
      %p14 = scmp.ge.s32.totalorder %s13, 4
      %s23 = sphi 0, %s25
      %s26 = sphi 0, %s23
      %s27 = sphi 0, %s26
      %s43 = sphi 0, %s27
      %s47 = sphi 0, %s47
      %s49 = sphi 0, %s47
      %s50 = sphi 0, %s49
      %s64 = sphi 0, %s50
      %s68 = sphi 0, %s68
      %s70 = sphi 0, %s68
      %s71 = sphi 0, %s70
      %s85 = sphi 0, %s71
      %s89 = sphi 0, %s89
      %s91 = sphi 0, %s89
      %s92 = sphi 0, %s91
      %s106 = sphi 0, %s92
      %s112 = sphi 0, %s114
      %s115 = sphi 0, %s112
      %s116 = sphi 0, %s115
      %s132 = sphi 0, %s116
    $region4: #{forward.1} parent=1 // loop_header_branch
      %16 = sbr.rel (%p14) target = $region8
    $region5: #{forward.1} parent=1 // loop_body
      %s18 = ssub.s32 %s13, 1
      %s19 = ssub.s32 %s13, 2
      %s20 = sadd.s32 %s13, 1
      %s21 = ssub.s32 %s13, %s20
      %p22 = scmp.eq.s32.totalorder %s21, 0
      %s24 = sadd.s32 %s23, 1
      %s25 = scalar_select %p22, %s23, %s24
      %p28 = pneg %p22
      %p29 = scmp.eq.s32.totalorder %s13, 1
      %p30 = por %p28, %p29
      %p31 = scmp.ne.s32.totalorder %s23, %s26
      %p32 = scmp.eq.s32.totalorder %s13, 0
      %p33 = por %p31, %p32
      %p34 = scmp.ne.s32.totalorder %s23, %s26
      %p35 = scmp.eq.s32.totalorder %s18, 1
      %p36 = por %p34, %p35
      %p37 = scmp.ne.s32.totalorder %s26, %s27
      %p38 = scmp.eq.s32.totalorder %s18, 0
      %p39 = por %p37, %p38
      %p40 = scmp.ne.s32.totalorder %s26, %s27
      %p41 = scmp.eq.s32.totalorder %s19, 1
      %p42 = por %p40, %p41
      %p44 = scmp.ne.s32.totalorder %s27, %s43
      %p45 = scmp.eq.s32.totalorder %s19, 0
      %p46 = por %p44, %p45
      %s48 = sadd.s32 %s47, 1
      %p51 = scmp.eq.s32.totalorder %s13, 1
      %p52 = scmp.ne.s32.totalorder %s47, %s49
      %p53 = scmp.eq.s32.totalorder %s13, 0
      %p54 = por %p52, %p53
      %p55 = scmp.ne.s32.totalorder %s47, %s49
      %p56 = scmp.eq.s32.totalorder %s18, 1
      %p57 = por %p55, %p56
      %p58 = scmp.ne.s32.totalorder %s49, %s50
      %p59 = scmp.eq.s32.totalorder %s18, 0
      %p60 = por %p58, %p59
      %p61 = scmp.ne.s32.totalorder %s49, %s50
      %p62 = scmp.eq.s32.totalorder %s19, 1
      %p63 = por %p61, %p62
      %p65 = scmp.ne.s32.totalorder %s50, %s64
      %p66 = scmp.eq.s32.totalorder %s19, 0
      %p67 = por %p65, %p66
      %s69 = sadd.s32 %s68, 1
      %p72 = scmp.eq.s32.totalorder %s13, 1
      %p73 = scmp.ne.s32.totalorder %s68, %s70
      %p74 = scmp.eq.s32.totalorder %s13, 0
      %p75 = por %p73, %p74
      %p76 = scmp.ne.s32.totalorder %s68, %s70
      %p77 = scmp.eq.s32.totalorder %s18, 1
      %p78 = por %p76, %p77
      %p79 = scmp.ne.s32.totalorder %s70, %s71
      %p80 = scmp.eq.s32.totalorder %s18, 0
      %p81 = por %p79, %p80
      %p82 = scmp.ne.s32.totalorder %s70, %s71
      %p83 = scmp.eq.s32.totalorder %s19, 1
      %p84 = por %p82, %p83
      %p86 = scmp.ne.s32.totalorder %s71, %s85
      %p87 = scmp.eq.s32.totalorder %s19, 0
      %p88 = por %p86, %p87
      %s90 = sadd.s32 %s89, 1
      %p93 = scmp.eq.s32.totalorder %s13, 1
      %p94 = scmp.ne.s32.totalorder %s89, %s91
      %p95 = scmp.eq.s32.totalorder %s13, 0
      %p96 = por %p94, %p95
      %p97 = scmp.ne.s32.totalorder %s89, %s91
      %p98 = scmp.eq.s32.totalorder %s18, 1
      %p99 = por %p97, %p98
      %p100 = scmp.ne.s32.totalorder %s91, %s92
      %p101 = scmp.eq.s32.totalorder %s18, 0
      %p102 = por %p100, %p101
      %p103 = scmp.ne.s32.totalorder %s91, %s92
      %p104 = scmp.eq.s32.totalorder %s19, 1
      %p105 = por %p103, %p104
      %p107 = scmp.ne.s32.totalorder %s92, %s106
      %p108 = scmp.eq.s32.totalorder %s19, 0
      %p109 = por %p107, %p108
      %s110 = ssub.s32 %s13, %s20
      %p111 = scmp.eq.s32.totalorder %s110, 0
      %s113 = sadd.s32 %s112, 1
      %s114 = scalar_select %p111, %s112, %s113
      %p117 = pneg %p111
      %p118 = scmp.eq.s32.totalorder %s13, 1
      %p119 = por %p117, %p118
      %p120 = scmp.ne.s32.totalorder %s112, %s115
      %p121 = scmp.eq.s32.totalorder %s13, 0
      %p122 = por %p120, %p121
      %p123 = scmp.ne.s32.totalorder %s112, %s115
      %p124 = scmp.eq.s32.totalorder %s18, 1
      %p125 = por %p123, %p124
      %p126 = scmp.ne.s32.totalorder %s115, %s116
      %p127 = scmp.eq.s32.totalorder %s18, 0
      %p128 = por %p126, %p127
      %p129 = scmp.ne.s32.totalorder %s115, %s116
      %p130 = scmp.eq.s32.totalorder %s19, 1
      %p131 = por %p129, %p130
      %p133 = scmp.ne.s32.totalorder %s116, %s132
      %p134 = scmp.eq.s32.totalorder %s19, 0
      %p135 = por %p133, %p134
      %p136 = scmp.le.s32.totalorder 1, %s13
      %p137 = scmp.lt.s32.totalorder %s13, 3
      %p138 = pnand %p136, %p137
      %p139 = pneg %p138
      // Predicated region
      $region9: #{forward.1} parent=5 // pred_check
        _
      $region10: #{forward.1} parent=5 // pred_check_branch
        %141 = sbr.rel (%p138) target = $region12
      $region11: #{forward.1} parent=5 // pred_region
        %s142 = ssub.s32 %s13, 1
        // Predicated region
        $region13: #{forward.1} parent=11 // pred_check
          %p143 = pneg %p60
        $region14: #{forward.1} parent=11 // pred_check_branch
          %145 = sbr.rel (%p143) target = $region16
        $region15: #{forward.1} parent=11 // pred_region
          _
        $region16: #{forward.1} parent=11 // pred_fallthru
          _
        // Predicated region
        $region17: #{forward.1} parent=11 // pred_check
          %p146 = pneg %p81
        $region18: #{forward.1} parent=11 // pred_check_branch
          %148 = sbr.rel (%p146) target = $region20
        $region19: #{forward.1} parent=11 // pred_region
          _
        $region20: #{forward.1} parent=11 // pred_fallthru
          _
        // Predicated region
        $region21: #{forward.1} parent=11 // pred_check
          %p149 = pneg %p102
        $region22: #{forward.1} parent=11 // pred_check_branch
          %151 = sbr.rel (%p149) target = $region24
        $region23: #{forward.1} parent=11 // pred_region
          _
        $region24: #{forward.1} parent=11 // pred_fallthru
          _
      $region12: #{forward.1} parent=5 // pred_fallthru
        _
      %p152 = scmp.lt.s32.totalorder %s13, 2
      // Predicated region
      $region25: #{forward.1} parent=5 // pred_check
        %p153 = pneg %p152
      $region26: #{forward.1} parent=5 // pred_check_branch
        %155 = sbr.rel (%p153) target = $region28
      $region27: #{forward.1} parent=5 // pred_region
        // Predicated region
        $region29: #{forward.1} parent=27 // pred_check
          %p156 = pneg %p33
        $region30: #{forward.1} parent=27 // pred_check_branch
          %158 = sbr.rel (%p156) target = $region32
        $region31: #{forward.1} parent=27 // pred_region
          %s159 = sand.u32 %s23, 1
          %s160 = sand.u32 %s23, 1
          %s161 = smul.addr %s160, 32
          %s162 = scalar_lea.vmem [#allocation2], %s161
          %s163 = smul.u32 2, %s13
          %s164 = smul.addr %s163, 4
          %s165 = scalar_lea.vmem %s0, %s164
          // Predicated region
          $region33: #{forward.1} parent=31 // pred_check
            _
          $region34: #{forward.1} parent=31 // pred_check_branch
            %167 = sbr.rel (0) target = $region36
          $region35: #{forward.1} parent=31 // pred_region
            // Predicated region
            $region37: #{forward.1} parent=35 // pred_check
              _
            $region38: #{forward.1} parent=35 // pred_check_branch
              %169 = sbr.rel (0) target = $region40
            $region39: #{forward.1} parent=35 // pred_region
              // Predicated region
              $region52: #{forward.1} parent=39 // pred_check
                _
              $region53: #{forward.1} parent=39 // pred_check_branch
                %191 = sbr.rel (0) target = $region55
              $region54: #{forward.1} parent=39 // pred_region
                loop: start=0, step=1, limit=1
                $region56: #{forward.1} parent=54 // loop_pre_header
                  _
                $region57: #{forward.1} parent=54 // loop_header
                  %s193 = sphi 0, %s197
                  %p194 = scmp.ge.s32.totalorder %s193, 1
                  %s198 = sphi %s165, %s165
                  %s199 = sphi %s162, %s162
                $region58: #{forward.1} parent=54 // loop_header_branch
                  %196 = sbr.rel (%p194) target = $region62
                $region59: #{forward.1} parent=54 // loop_body
                  %v200 = vld [vmem:[%s198] sm:$0xff]
                  %201 = vst [vmem:[%s199] sm:$0xff] %v200
                  %v202 = vld [vmem:[%s198 + $0x10] sm:$0xff]
                  %203 = vst [vmem:[%s199 + $0x8] sm:$0xff] %v202
                  %v204 = vld [vmem:[%s198 + $0x20] sm:$0xff]
                  %205 = vst [vmem:[%s199 + $0x10] sm:$0xff] %v204
                  %v206 = vld [vmem:[%s198 + $0x30] sm:$0xff]
                  %207 = vst [vmem:[%s199 + $0x18] sm:$0xff] %v206
                $region60: #{forward.1} parent=54 // loop_footer
                  %s197 = sadd.s32 1, %s193
                $region61: #{forward.1} parent=54 // loop_footer_branch
                  %192 = sbr.rel target = $region57
                $region62: #{forward.1} parent=54 // loop_exit
                  _
              $region55: #{forward.1} parent=39 // pred_fallthru
                _
              // Predicated region
              $region63: #{forward.1} parent=39 // pred_check
                _
              $region64: #{forward.1} parent=39 // pred_check_branch
                %209 = sbr.rel target = $region66
              $region65: #{forward.1} parent=39 // pred_region
                _
              $region66: #{forward.1} parent=39 // pred_fallthru
                _
            $region40: #{forward.1} parent=35 // pred_fallthru
              _
            // Predicated region
            $region41: #{forward.1} parent=35 // pred_check
              _
            $region42: #{forward.1} parent=35 // pred_check_branch
              %171 = sbr.rel target = $region44
            $region43: #{forward.1} parent=35 // pred_region
              %s173 = ssub.s32 256, 1
              loop: start=0, step=1, limit=1
              $region45: #{forward.1} parent=43 // loop_pre_header
                _
              $region46: #{forward.1} parent=43 // loop_header
                %s175 = sphi 0, %s179
                %p176 = scmp.ge.s32.totalorder %s175, 1
                %s180 = sphi %s165, %s165
                %s181 = sphi %s162, %s162
              $region47: #{forward.1} parent=43 // loop_header_branch
                %178 = sbr.rel (%p176) target = $region51
              $region48: #{forward.1} parent=43 // loop_body
                %v182 = vld [vmem:[%s180] sm:%s173]
                %183 = vst [vmem:[%s181] sm:%s173] %v182
                %v184 = vld [vmem:[%s180 + $0x10] sm:%s173]
                %185 = vst [vmem:[%s181 + $0x8] sm:%s173] %v184
                %v186 = vld [vmem:[%s180 + $0x20] sm:%s173]
                %187 = vst [vmem:[%s181 + $0x10] sm:%s173] %v186
                %v188 = vld [vmem:[%s180 + $0x30] sm:%s173]
                %189 = vst [vmem:[%s181 + $0x18] sm:%s173] %v188
              $region49: #{forward.1} parent=43 // loop_footer
                %s179 = sadd.s32 1, %s175
              $region50: #{forward.1} parent=43 // loop_footer_branch
                %174 = sbr.rel target = $region46
              $region51: #{forward.1} parent=43 // loop_exit
                _
            $region44: #{forward.1} parent=35 // pred_fallthru
              _
          $region36: #{forward.1} parent=31 // pred_fallthru
            _
          %210 = vnop
        $region32: #{forward.1} parent=27 // pred_fallthru
          _
      $region28: #{forward.1} parent=5 // pred_fallthru
        _
      %p211 = scmp.le.s32.totalorder 1, %s13
      %p212 = scmp.lt.s32.totalorder %s13, 3
      %p213 = pnand %p211, %p212
      %p214 = pneg %p213
      // Predicated region
      $region67: #{forward.1} parent=5 // pred_check
        _
      $region68: #{forward.1} parent=5 // pred_check_branch
        %216 = sbr.rel (%p213) target = $region70
      $region69: #{forward.1} parent=5 // pred_region
        %s217 = ssub.s32 %s13, 1
        %s218 = sand.u32 %s26, 1
        %s219 = sand.u32 %s26, 1
        %s220 = smul.addr %s219, 32
        %s221 = scalar_lea.vmem [#allocation2], %s220
        // Predicated region
        $region71: #{forward.1} parent=69 // pred_check
          %p222 = pneg %p39
        $region72: #{forward.1} parent=69 // pred_check_branch
          %224 = sbr.rel (%p222) target = $region74
        $region73: #{forward.1} parent=69 // pred_region
          _
        $region74: #{forward.1} parent=69 // pred_fallthru
          _
        %s225 = sand.u32 %s26, 1
        %s226 = sand.u32 %s26, 1
        %s227 = smul.addr %s226, 32
        %s228 = scalar_lea.vmem [#allocation2], %s227
        %p229 = pneg %p39
        %p230 = pneg %p36
        %p231 = pneg %p60
        %p232 = pneg %p57
        %p233 = pneg %p81
        %p234 = pneg %p78
        %p235 = pneg %p102
        %p236 = pneg %p99
        %p237 = pneg %p128
        %p238 = pneg %p125
        %s239 = sand.u32 %s115, 1
        %s240 = scalar_lea.sflag [#allocation4], %s239
        %s241 = sand.u32 %s115, 1
        %s242 = smul.addr %s241, 2
        %s243 = scalar_lea.vmem [#allocation3], %s242
        %s244 = smul.u32 2, %s18
        %s245 = smul.u32 2, %s18
        %v247 = vld [vmem:[%s221] sm:$0xff]
        %v248 = vld [vmem:[%s221 + $0x8] sm:$0xff]
        %v249 = vld [vmem:[%s221 + $0x10] sm:$0xff]
        %v250 = vld [vmem:[%s221 + $0x18] sm:$0xff]
        %v251 = vld [vmem:[%s1] sm:$0xf]
        %v256 = vunpack.c.l.b16 %v247
        %v257 = vunpack.c.h.b16 %v247
        %v258 = vunpack.c.l.b16 %v248
        %v259 = vunpack.c.h.b16 %v248
        %v260 = vunpack.c.l.b16 %v249
        %v261 = vunpack.c.h.b16 %v249
        %v262 = vunpack.c.l.b16 %v250
        %v263 = vunpack.c.h.b16 %v250
        %v264 = vpack.c.b16 %v258, %v256
        %v265 = vpack.c.b16 %v259, %v257
        %v266 = vpack.c.b16 %v262, %v260
        %v267 = vpack.c.b16 %v263, %v261
        %vm272 = vcmask 261120
        %v274 = vsel %vm272, %v251, 0
        %276 = vmatprep.subr.bf16.mxu0 0
        %277 = vmatpush1.bf16.msra.mxu0 0
        %278 = vmatprep.subr.bf16.mxu0 0
        %279 = vmatpush1.bf16.msra.mxu0 0
        %280 = vmatprep.subr.bf16.mxu0 0
        %281 = vmatpush1.bf16.msra.mxu0 0
        %282 = vmatprep.subr.bf16.mxu0 0
        %283 = vmatpush1.bf16.msra.mxu0 0
        %284 = vmatprep.subr.bf16.mxu0 0
        %285 = vmatpush1.bf16.msra.mxu0 0
        %286 = vmatprep.subr.bf16.mxu0 0
        %287 = vmatpush1.bf16.msra.mxu0 0
        %288 = vmatprep.subr.bf16.mxu0 %v267
        %289 = vmatpush1.bf16.msra.mxu0 %v266
        %290 = vmatprep.subr.bf16.mxu0 %v265
        %291 = vmatpush1.bf16.msra.mxu0 %v264
        %292 = vmatprep.subr.bf16.mxu0 0
        %293 = vmatpush2.bf16.msra.mxu0 0
        %294 = vmatprep.subr.bf16.mxu0 0
        %295 = vmatpush2.bf16.msra.mxu0 0
        %296 = vmatprep.subr.bf16.mxu0 0
        %297 = vmatpush2.bf16.msra.mxu0 0
        %298 = vmatprep.subr.bf16.mxu0 0
        %299 = vmatpush2.bf16.msra.mxu0 0
        %300 = vmatprep.subr.bf16.mxu0 0
        %301 = vmatpush2.bf16.msra.mxu0 0
        %302 = vmatprep.subr.bf16.mxu0 0
        %303 = vmatpush2.bf16.msra.mxu0 0
        %304 = vmatprep.subr.bf16.mxu0 0
        %305 = vmatpush2.bf16.msra.mxu0 0
        %306 = vmatprep.subr.bf16.mxu0 0
        %307 = vmatpush2.bf16.msra.mxu0 0
        %308 = vmatprep.mubr.bf16.mxu0 0
        %309 = vmatmul.mubr.bf16.gmra.mxu0 %v274
        %v310 = vpop.f32.mrf.mxu0
        %v311 = vadd.f32 0.0, %v310
        %v312 = vpop.f32.mrf.mxu0
        %v313 = vadd.f32 0.0, %v312
        %v314 = vpop.f32.mrf.mxu0
        %v315 = vpop.f32.mrf.mxu0
        %316 = vdwg.mxu0
        %v317 = vld [vmem:[%s3] sm:$0xff]
        %v318 = vlaneseq
        %v319 = vshrl.u32 %v318, 7
        %v320 = vsub.s32 0, %v319
        %v321 = vrot.slane %v311, %v320
        %v322 = vlaneseq
        %v323 = vshrl.u32 %v322, 7
        %v324 = vsub.s32 0, %v323
        %v325 = vrot.slane %v313, %v324
        %v326 = vmul.f32 %v311, %v321
        %v327 = vmul.f32 %v313, %v325
        %329 = vset.pattern.permute.xlu0 2
        %330 = vperm.xlu0 %329, %v317
        %v331 = vpop.permute.xlu0 %330
        %v333 = vadd.f32 %v326, %v331
        %v334 = vadd.f32 %v327, %v331
        %v335 = vadd.f32 %v333, %v311
        %v336 = vadd.f32 %v334, %v313
        %v337 = vlaneseq
        %v338 = vshrl.u32 %v337, 7
        %v339 = vsub.s32 1, %v338
        %v340 = vrot.slane %v335, %v339
        %v341 = vlaneseq
        %v342 = vshrl.u32 %v341, 7
        %v343 = vsub.s32 1, %v342
        %v344 = vrot.slane %v336, %v343
        %v345 = vmul.f32 %v311, %v340
        %v346 = vmul.f32 %v313, %v344
        %347 = vset.pattern.permute.xlu0 3
        %348 = vperm.xlu0 %347, %v317
        %v349 = vpop.permute.xlu0 %348
        %v351 = vadd.f32 %v345, %v349
        %v352 = vadd.f32 %v346, %v349
        %v353 = vadd.f32 %v351, %v335
        %v354 = vadd.f32 %v352, %v336
        %v355 = vlaneseq
        %v356 = vshrl.u32 %v355, 7
        %v357 = vsub.s32 2, %v356
        %v358 = vrot.slane %v353, %v357
        %v359 = vlaneseq
        %v360 = vshrl.u32 %v359, 7
        %v361 = vsub.s32 2, %v360
        %v362 = vrot.slane %v354, %v361
        %v363 = vmul.f32 %v311, %v358
        %v364 = vmul.f32 %v313, %v362
        %365 = vset.pattern.permute.xlu0 4
        %366 = vperm.xlu0 %365, %v317
        %v367 = vpop.permute.xlu0 %366
        %v369 = vadd.f32 %v363, %v367
        %v370 = vadd.f32 %v364, %v367
        %v371 = vadd.f32 %v369, %v353
        %v372 = vadd.f32 %v370, %v354
        %v373 = vlaneseq
        %v374 = vshrl.u32 %v373, 7
        %v375 = vsub.s32 3, %v374
        %v376 = vrot.slane %v371, %v375
        %v377 = vlaneseq
        %v378 = vshrl.u32 %v377, 7
        %v379 = vsub.s32 3, %v378
        %v380 = vrot.slane %v372, %v379
        %v381 = vmul.f32 %v311, %v376
        %v382 = vmul.f32 %v313, %v380
        %383 = vset.pattern.permute.xlu0 5
        %384 = vperm.xlu0 %383, %v317
        %v385 = vpop.permute.xlu0 %384
        %v387 = vadd.f32 %v381, %v385
        %v388 = vadd.f32 %v382, %v385
        %v389 = vadd.f32 %v387, %v371
        %v390 = vadd.f32 %v388, %v372
        %v391 = vlaneseq
        %v392 = vshrl.u32 %v391, 7
        %v393 = vsub.s32 4, %v392
        %v394 = vrot.slane %v389, %v393
        %v395 = vlaneseq
        %v396 = vshrl.u32 %v395, 7
        %v397 = vsub.s32 4, %v396
        %v398 = vrot.slane %v390, %v397
        %v399 = vmul.f32 %v311, %v394
        %v400 = vmul.f32 %v313, %v398
        %401 = vset.pattern.permute.xlu0 6
        %402 = vperm.xlu0 %401, %v317
        %v403 = vpop.permute.xlu0 %402
        %v405 = vadd.f32 %v399, %v403
        %v406 = vadd.f32 %v400, %v403
        %v407 = vadd.f32 %v405, %v389
        %v408 = vadd.f32 %v406, %v390
        %v409 = vld [vmem:[%s2] sm:$0xf]
        %v410 = vld [vmem:[%s2 + $0x4] sm:$0xf]
        %v411 = vld [vmem:[%s2 + $0x8] sm:$0xf]
        %v412 = vld [vmem:[%s2 + $0xc] sm:$0xf]
        %v413 = vld [vmem:[%s2 + $0x10] sm:$0xf]
        %v414 = vld [vmem:[%s2 + $0x14] sm:$0xf]
        %v415 = vld [vmem:[%s2 + $0x18] sm:$0xf]
        %v416 = vld [vmem:[%s2 + $0x1c] sm:$0xf]
        %v417 = vld [vmem:[%s3] sm:$0xff]
        %v418 = vld [vmem:[%s3 + $0x8] sm:$0xff]
        %v419 = vld [vmem:[%s3 + $0x10] sm:$0xff]
        %v420 = vld [vmem:[%s3 + $0x18] sm:$0xff]
        %v421 = vld [vmem:[%s3 + $0x20] sm:$0xff]
        %v422 = vld [vmem:[%s3 + $0x28] sm:$0xff]
        %v423 = vld [vmem:[%s3 + $0x30] sm:$0xff]
        %v424 = vld [vmem:[%s3 + $0x38] sm:$0xff]
        %426 = vset.pattern.permute.xlu0 0
        %427 = vperm.xlu0 %426, %v417
        %v428 = vpop.permute.xlu0 %427
        %431 = vset.pattern.permute.xlu0 0
        %432 = vperm.xlu0 %431, %v418
        %v433 = vpop.permute.xlu0 %432
        %436 = vset.pattern.permute.xlu0 0
        %437 = vperm.xlu0 %436, %v419
        %v438 = vpop.permute.xlu0 %437
        %441 = vset.pattern.permute.xlu0 0
        %442 = vperm.xlu0 %441, %v420
        %v443 = vpop.permute.xlu0 %442
        %446 = vset.pattern.permute.xlu0 0
        %447 = vperm.xlu0 %446, %v421
        %v448 = vpop.permute.xlu0 %447
        %451 = vset.pattern.permute.xlu0 0
        %452 = vperm.xlu0 %451, %v422
        %v453 = vpop.permute.xlu0 %452
        %456 = vset.pattern.permute.xlu0 0
        %457 = vperm.xlu0 %456, %v423
        %v458 = vpop.permute.xlu0 %457
        %461 = vset.pattern.permute.xlu0 0
        %462 = vperm.xlu0 %461, %v424
        %v463 = vpop.permute.xlu0 %462
        %v473 = vunpack.c.l.b16 %v409
        %v474 = vunpack.c.l.b16 %v410
        %v475 = vunpack.c.l.b16 %v411
        %v476 = vunpack.c.l.b16 %v412
        %v477 = vunpack.c.l.b16 %v413
        %v478 = vunpack.c.l.b16 %v414
        %v479 = vunpack.c.l.b16 %v415
        %v480 = vunpack.c.l.b16 %v416
        %v481 = vpack.c.b16 %v474, %v473
        %v482 = vpack.c.b16 %v476, %v475
        %v483 = vpack.c.b16 %v478, %v477
        %v484 = vpack.c.b16 %v480, %v479
        %v486 = vsel %vm272, %v481, 0
        %v489 = vsel %vm272, %v482, 0
        %v492 = vsel %vm272, %v483, 0
        %v495 = vsel %vm272, %v484, 0
        %497 = vmatprep.subr.bf16.mxu0 0
        %498 = vmatpush1.bf16.msra.mxu0 0
        %499 = vmatprep.subr.bf16.mxu0 0
        %500 = vmatpush1.bf16.msra.mxu0 0
        %501 = vmatprep.subr.bf16.mxu0 0
        %502 = vmatpush1.bf16.msra.mxu0 0
        %503 = vmatprep.subr.bf16.mxu0 0
        %504 = vmatpush1.bf16.msra.mxu0 0
        %505 = vmatprep.subr.bf16.mxu0 0
        %506 = vmatpush1.bf16.msra.mxu0 0
        %507 = vmatprep.subr.bf16.mxu0 0
        %508 = vmatpush1.bf16.msra.mxu0 0
        %509 = vmatprep.subr.bf16.mxu0 %v267
        %510 = vmatpush1.bf16.msra.mxu0 %v266
        %511 = vmatprep.subr.bf16.mxu0 %v265
        %512 = vmatpush1.bf16.msra.mxu0 %v264
        %513 = vmatprep.subr.bf16.mxu0 0
        %514 = vmatpush2.bf16.msra.mxu0 0
        %515 = vmatprep.subr.bf16.mxu0 0
        %516 = vmatpush2.bf16.msra.mxu0 0
        %517 = vmatprep.subr.bf16.mxu0 0
        %518 = vmatpush2.bf16.msra.mxu0 0
        %519 = vmatprep.subr.bf16.mxu0 0
        %520 = vmatpush2.bf16.msra.mxu0 0
        %521 = vmatprep.subr.bf16.mxu0 0
        %522 = vmatpush2.bf16.msra.mxu0 0
        %523 = vmatprep.subr.bf16.mxu0 0
        %524 = vmatpush2.bf16.msra.mxu0 0
        %525 = vmatprep.subr.bf16.mxu0 0
        %526 = vmatpush2.bf16.msra.mxu0 0
        %527 = vmatprep.subr.bf16.mxu0 0
        %528 = vmatpush2.bf16.msra.mxu0 0
        %529 = vmatprep.mubr.bf16.mxu0 0
        %530 = vmatmul.mubr.bf16.gmra.mxu0 %v486
        %v531 = vpop.f32.mrf.mxu0
        %v532 = vadd.f32 %v428, %v531
        %v533 = vpop.f32.mrf.mxu0
        %v534 = vadd.f32 %v428, %v533
        %v535 = vpop.f32.mrf.mxu0
        %v536 = vadd.f32 %v433, %v535
        %v537 = vpop.f32.mrf.mxu0
        %v538 = vadd.f32 %v433, %v537
        %539 = vmatprep.mubr.bf16.mxu0 0
        %540 = vmatmul.mubr.bf16.gmra.mxu0 %v489
        %v541 = vpop.f32.mrf.mxu0
        %v542 = vadd.f32 %v438, %v541
        %v543 = vpop.f32.mrf.mxu0
        %v544 = vadd.f32 %v438, %v543
        %v545 = vpop.f32.mrf.mxu0
        %v546 = vadd.f32 %v443, %v545
        %v547 = vpop.f32.mrf.mxu0
        %v548 = vadd.f32 %v443, %v547
        %549 = vmatprep.mubr.bf16.mxu0 0
        %550 = vmatmul.mubr.bf16.gmra.mxu0 %v492
        %v551 = vpop.f32.mrf.mxu0
        %v552 = vadd.f32 %v448, %v551
        %v553 = vpop.f32.mrf.mxu0
        %v554 = vadd.f32 %v448, %v553
        %v555 = vpop.f32.mrf.mxu0
        %v556 = vadd.f32 %v453, %v555
        %v557 = vpop.f32.mrf.mxu0
        %v558 = vadd.f32 %v453, %v557
        %559 = vmatprep.mubr.bf16.mxu0 0
        %560 = vmatmul.mubr.bf16.gmra.mxu0 %v495
        %v561 = vpop.f32.mrf.mxu0
        %v562 = vadd.f32 %v458, %v561
        %v563 = vpop.f32.mrf.mxu0
        %v564 = vadd.f32 %v458, %v563
        %v565 = vpop.f32.mrf.mxu0
        %v566 = vadd.f32 %v463, %v565
        %v567 = vpop.f32.mrf.mxu0
        %v568 = vadd.f32 %v463, %v567
        %569 = vdwg.mxu0
        %v570 = vmax.f32 %v532, 0.0
        %v571 = vmax.f32 %v534, 0.0
        %v572 = vmax.f32 %v536, 0.0
        %v573 = vmax.f32 %v538, 0.0
        %v574 = vmax.f32 %v542, 0.0
        %v575 = vmax.f32 %v544, 0.0
        %v576 = vmax.f32 %v546, 0.0
        %v577 = vmax.f32 %v548, 0.0
        %v578 = vmax.f32 %v552, 0.0
        %v579 = vmax.f32 %v554, 0.0
        %v580 = vmax.f32 %v556, 0.0
        %v581 = vmax.f32 %v558, 0.0
        %v582 = vmax.f32 %v562, 0.0
        %v583 = vmax.f32 %v564, 0.0
        %v584 = vmax.f32 %v566, 0.0
        %v585 = vmax.f32 %v568, 0.0
        %v586 = vpack.c.bf16 %v572, %v570
        %v587 = vpack.c.bf16 %v573, %v571
        %v588 = vpack.c.bf16 %v576, %v574
        %v589 = vpack.c.bf16 %v577, %v575
        %v590 = vpack.c.bf16 %v580, %v578
        %v591 = vpack.c.bf16 %v581, %v579
        %v592 = vpack.c.bf16 %v584, %v582
        %v593 = vpack.c.bf16 %v585, %v583
        %v594 = vld [vmem:[%s2 + $0x20] sm:$0xf]
        %v595 = vld [vmem:[%s2 + $0x24] sm:$0xf]
        %v596 = vld [vmem:[%s2 + $0x28] sm:$0xf]
        %v597 = vld [vmem:[%s2 + $0x2c] sm:$0xf]
        %v598 = vld [vmem:[%s3] sm:$0xff]
        %v599 = vld [vmem:[%s3 + $0x8] sm:$0xff]
        %v600 = vld [vmem:[%s3 + $0x10] sm:$0xff]
        %v601 = vld [vmem:[%s3 + $0x18] sm:$0xff]
        %603 = vset.pattern.permute.xlu0 1
        %604 = vperm.xlu0 %603, %v598
        %v605 = vpop.permute.xlu0 %604
        %608 = vset.pattern.permute.xlu0 1
        %609 = vperm.xlu0 %608, %v599
        %v610 = vpop.permute.xlu0 %609
        %613 = vset.pattern.permute.xlu0 1
        %614 = vperm.xlu0 %613, %v600
        %v615 = vpop.permute.xlu0 %614
        %618 = vset.pattern.permute.xlu0 1
        %619 = vperm.xlu0 %618, %v601
        %v620 = vpop.permute.xlu0 %619
        %v626 = vunpack.c.l.b16 %v594
        %v627 = vunpack.c.l.b16 %v595
        %v628 = vunpack.c.l.b16 %v596
        %v629 = vunpack.c.l.b16 %v597
        %v630 = vpack.c.b16 %v627, %v626
        %v631 = vpack.c.b16 %v629, %v628
        %vm632 = vcmask 523264
        %v634 = vsel %vm632, %v630, 0
        %v637 = vsel %vm632, %v631, 0
        %639 = vmatprep.subr.bf16.mxu0 0
        %640 = vmatpush1.bf16.msra.mxu0 0
        %641 = vmatprep.subr.bf16.mxu0 0
        %642 = vmatpush1.bf16.msra.mxu0 0
        %643 = vmatprep.subr.bf16.mxu0 0
        %644 = vmatpush1.bf16.msra.mxu0 0
        %645 = vmatprep.subr.bf16.mxu0 0
        %646 = vmatpush1.bf16.msra.mxu0 0
        %647 = vmatprep.subr.bf16.mxu0 %v593
        %648 = vmatpush1.bf16.msra.mxu0 %v592
        %649 = vmatprep.subr.bf16.mxu0 %v591
        %650 = vmatpush1.bf16.msra.mxu0 %v590
        %651 = vmatprep.subr.bf16.mxu0 %v589
        %652 = vmatpush1.bf16.msra.mxu0 %v588
        %653 = vmatprep.subr.bf16.mxu0 %v587
        %654 = vmatpush1.bf16.msra.mxu0 %v586
        %655 = vmatprep.subr.bf16.mxu0 0
        %656 = vmatpush2.bf16.msra.mxu0 0
        %657 = vmatprep.subr.bf16.mxu0 0
        %658 = vmatpush2.bf16.msra.mxu0 0
        %659 = vmatprep.subr.bf16.mxu0 0
        %660 = vmatpush2.bf16.msra.mxu0 0
        %661 = vmatprep.subr.bf16.mxu0 0
        %662 = vmatpush2.bf16.msra.mxu0 0
        %663 = vmatprep.subr.bf16.mxu0 0
        %664 = vmatpush2.bf16.msra.mxu0 0
        %665 = vmatprep.subr.bf16.mxu0 0
        %666 = vmatpush2.bf16.msra.mxu0 0
        %667 = vmatprep.subr.bf16.mxu0 0
        %668 = vmatpush2.bf16.msra.mxu0 0
        %669 = vmatprep.subr.bf16.mxu0 0
        %670 = vmatpush2.bf16.msra.mxu0 0
        %671 = vmatprep.mubr.bf16.mxu0 0
        %672 = vmatmul.mubr.bf16.gmra.mxu0 %v634
        %v673 = vpop.f32.mrf.mxu0
        %v674 = vadd.f32 %v605, %v673
        %v675 = vpop.f32.mrf.mxu0
        %v676 = vadd.f32 %v605, %v675
        %v677 = vpop.f32.mrf.mxu0
        %v678 = vadd.f32 %v610, %v677
        %v679 = vpop.f32.mrf.mxu0
        %v680 = vadd.f32 %v610, %v679
        %681 = vmatprep.mubr.bf16.mxu0 0
        %682 = vmatmul.mubr.bf16.gmra.mxu0 %v637
        %v683 = vpop.f32.mrf.mxu0
        %v684 = vadd.f32 %v615, %v683
        %v685 = vpop.f32.mrf.mxu0
        %v686 = vadd.f32 %v615, %v685
        %v687 = vpop.f32.mrf.mxu0
        %v688 = vadd.f32 %v620, %v687
        %v689 = vpop.f32.mrf.mxu0
        %v690 = vadd.f32 %v620, %v689
        %691 = vdwg.mxu0
        %v692 = vmax.f32 %v674, 0.0
        %v693 = vmax.f32 %v676, 0.0
        %v694 = vmax.f32 %v678, 0.0
        %v695 = vmax.f32 %v680, 0.0
        %v696 = vmax.f32 %v684, 0.0
        %v697 = vmax.f32 %v686, 0.0
        %v698 = vmax.f32 %v688, 0.0
        %v699 = vmax.f32 %v690, 0.0
        %v700 = vpack.c.bf16 %v694, %v692
        %v701 = vpack.c.bf16 %v695, %v693
        %v702 = vpack.c.bf16 %v698, %v696
        %v703 = vpack.c.bf16 %v699, %v697
        %v704 = vld [vmem:[%s2 + $0x30] sm:$0xf]
        %v705 = vld [vmem:[%s2 + $0x34] sm:$0xf]
        %v708 = vunpack.c.l.b16 %v704
        %v709 = vunpack.c.l.b16 %v705
        %v710 = vpack.c.b16 %v709, %v708
        %v712 = vsel %vm272, %v710, 0
        %714 = vmatprep.subr.bf16.mxu0 0
        %715 = vmatpush1.bf16.msra.mxu0 0
        %716 = vmatprep.subr.bf16.mxu0 0
        %717 = vmatpush1.bf16.msra.mxu0 0
        %718 = vmatprep.subr.bf16.mxu0 0
        %719 = vmatpush1.bf16.msra.mxu0 0
        %720 = vmatprep.subr.bf16.mxu0 0
        %721 = vmatpush1.bf16.msra.mxu0 0
        %722 = vmatprep.subr.bf16.mxu0 0
        %723 = vmatpush1.bf16.msra.mxu0 0
        %724 = vmatprep.subr.bf16.mxu0 0
        %725 = vmatpush1.bf16.msra.mxu0 0
        %726 = vmatprep.subr.bf16.mxu0 %v703
        %727 = vmatpush1.bf16.msra.mxu0 %v702
        %728 = vmatprep.subr.bf16.mxu0 %v701
        %729 = vmatpush1.bf16.msra.mxu0 %v700
        %730 = vmatprep.subr.bf16.mxu0 0
        %731 = vmatpush2.bf16.msra.mxu0 0
        %732 = vmatprep.subr.bf16.mxu0 0
        %733 = vmatpush2.bf16.msra.mxu0 0
        %734 = vmatprep.subr.bf16.mxu0 0
        %735 = vmatpush2.bf16.msra.mxu0 0
        %736 = vmatprep.subr.bf16.mxu0 0
        %737 = vmatpush2.bf16.msra.mxu0 0
        %738 = vmatprep.subr.bf16.mxu0 0
        %739 = vmatpush2.bf16.msra.mxu0 0
        %740 = vmatprep.subr.bf16.mxu0 0
        %741 = vmatpush2.bf16.msra.mxu0 0
        %742 = vmatprep.subr.bf16.mxu0 0
        %743 = vmatpush2.bf16.msra.mxu0 0
        %744 = vmatprep.subr.bf16.mxu0 0
        %745 = vmatpush2.bf16.msra.mxu0 0
        %746 = vmatprep.mubr.bf16.mxu0 0
        %747 = vmatmul.mubr.bf16.gmra.mxu0 %v712
        %v748 = vpop.f32.mrf.mxu0
        %v749 = vadd.f32 0.0, %v748
        %v750 = vpop.f32.mrf.mxu0
        %v751 = vadd.f32 0.0, %v750
        %v752 = vpop.f32.mrf.mxu0
        %v753 = vpop.f32.mrf.mxu0
        %754 = vdwg.mxu0
        %v755 = vld [vmem:[%s3] sm:$0x1]
        %v758 = vrot.slane %v749, 3
        %v759 = vrot.slane %v751, 3
        %v762 = vadd.f32 %v407, %v758
        %v763 = vadd.f32 %v408, %v759
        %765 = vset.pattern.permute.xlu0 7
        %766 = vperm.xlu0 %765, %v755
        %v767 = vpop.permute.xlu0 %766
        %v768 = vrot.slane %v767, 3
        %v770 = vadd.f32 %v762, %v768
        %v771 = vadd.f32 %v763, %v768
        %v772 = vxor.u32 %v770, 2147483648
        %v773 = vxor.u32 %v771, 2147483648
        %v774 = vmul.f32 %v772, 1.442695
        %v775 = vpow.pop %v774
        %v776 = vmul.f32 %v773, 1.442695
        %v777 = vpow.pop %v776
        %v778 = vadd.f32 %v775, 1.0
        %v779 = vadd.f32 %v777, 1.0
        %v780 = vrcp.pop %v778
        %v781 = vmul.f32 1.0, %v780
        %v782 = vrcp.pop %v779
        %v783 = vmul.f32 1.0, %v782
        %v786 = vcombine.high %v781, %v783
        %v788 = vunpack.c.l.s4 1966171168
        %v789 = vunpack.c.0.s8 %v788
        %v790 = vlaneseq
        %v791 = vshrl.u32 %v790, 7
        %v792 = vsub.s32 %v789, %v791
        %v793 = vrot.slane %v786, %v792
        %v794 = vcombine.high %v793, %v793
        %v796 = vunpack.c.l.s4 1966171168
        %v797 = vunpack.c.0.s8 %v796
        %v798 = vlaneseq
        %v799 = vshrl.u32 %v798, 7
        %v800 = vsub.s32 %v797, %v799
        %v801 = vrot.slane %v794, %v800
        %v803 = vlaneseq
        %vm804 = vcmp.ge.s32.totalorder %v803, 0
        %vm805 = vcmp.lt.s32.totalorder %v803, 256
        %vm806 = vmand %vm804, %vm805
        %807 = vst.msk [vmem:[%s243] sm:$0x3] %vm806, %v801
        %s808 = sand.u32 %s115, 1
        %s809 = scalar_lea.sflag [#allocation4], %s808
        %s810 = sand.u32 %s115, 1
        %s811 = smul.addr %s810, 2
        %s812 = scalar_lea.vmem [#allocation3], %s811
        // Predicated region
        $region75: #{forward.1} parent=69 // pred_check
          %p813 = pneg %p125
        $region76: #{forward.1} parent=69 // pred_check_branch
          %815 = sbr.rel (%p813) target = $region78
        $region77: #{forward.1} parent=69 // pred_region
          %s816 = smul.u32 2, %s18
          %s818 = ssub.s32 32, 32
          %819 = vsyncadd %s809, %s818
          %s820 = smul.addr %s816, 16
          %s821 = scalar_lea.hbm %s4, %s820
          %s823 = sshll.u32 %s812, 4
          %s824 = int_to_ptr.vmem [resolvable:$true] %s823
          %826 = dma.vmem_to_hbm [thread:$0]  %s824, 32, %s821, %s809
        $region78: #{forward.1} parent=69 // pred_fallthru
          _
      $region70: #{forward.1} parent=5 // pred_fallthru
        _
      %p827 = scmp.le.s32.totalorder 2, %s13
      // Predicated region
      $region79: #{forward.1} parent=5 // pred_check
        %p828 = pneg %p827
      $region80: #{forward.1} parent=5 // pred_check_branch
        %830 = sbr.rel (%p828) target = $region82
      $region81: #{forward.1} parent=5 // pred_region
        %s831 = ssub.s32 %s13, 2
        // Predicated region
        $region83: #{forward.1} parent=81 // pred_check
          %p832 = pneg %p131
        $region84: #{forward.1} parent=81 // pred_check_branch
          %834 = sbr.rel (%p832) target = $region86
        $region85: #{forward.1} parent=81 // pred_region
          %s835 = sand.u32 %s116, 1
          %s836 = scalar_lea.sflag [#allocation4], %s835
          %s837 = sand.u32 %s116, 1
          %s838 = smul.addr %s837, 2
          %s839 = scalar_lea.vmem [#allocation3], %s838
          %840 = dma.done %s836, 32
        $region86: #{forward.1} parent=81 // pred_fallthru
          _
      $region82: #{forward.1} parent=5 // pred_fallthru
        _
    $region6: #{forward.1} parent=1 // loop_footer
      %s17 = sadd.s32 1, %s13
    $region7: #{forward.1} parent=1 // loop_footer_branch
      %12 = sbr.rel target = $region3
    $region8: #{forward.1} parent=1 // loop_exit
      _
    %841 = vsyncpa [#allocation4], 1
    %s842 = scalar_lea.sflag [#allocation4], 1
    %843 = vsyncpa %s842, 1

</llo_original>
